<compile_context>
chip_gen: v6e
topology: v6e:2x2x1
jax: 0.10.0
libtpu: 0.0.40
codegen_flags: <defaults>
</compile_context>

<pallas_src>
import functools

import jax
import jax.numpy as jnp
from jax import lax
from jax.experimental import pallas as pl
from jax.experimental.pallas import tpu as pltpu

_MXU_CONTRACT = 256  # contraction width that already fills a v6e/v7x MXU pass


def _round_up(x, m):
    return (x + m - 1) // m * m


def _shift_conv_kernel(r_ref, l_ref, c_ref, rc_ref, w_ref, b_ref, o_ref, *,
                       fold, H, W, K, stride, padding, OH, OW, B, HWp,
                       op_dtype, taps_per_group):
    """One grid step = B batch elements stacked along the lane axis.

    r_ref:  (B, 1, fold, H*W)   `right`  channels [0:fold)
    l_ref:  (B, 1, fold, H*W)   `left`   channels [fold:2*fold)
    c_ref:  (B, C, H*W)         `center` (channels [2*fold:) used)
    rc_ref: (2, B*HWp) int32    per-image flat row / col ids
    w_ref:  (Cout, K*K*C)       weights, tap-major then input channel
    b_ref:  (Cout, 1) f32
    o_ref:  (B, Cout, OH*OW)
    """
    C = c_ref.shape[1]
    HW = H * W
    L = B * HWp
    p = padding

    # ---- temporal channel shift: assemble the (C, L) conv-input slab -------
    # Channel-group boundaries are multiples of `fold`; for realistic SlimCNN
    # sizes fold % 8 == 0, so this sublane concat is tile-aligned (cheap).
    slabs = []
    for b in range(B):
        xb = jnp.concatenate(
            [r_ref[b, 0], l_ref[b, 0], c_ref[b, 2 * fold:, :]], axis=0)  # (C, HW)
        if HWp > HW:
            xb = jnp.concatenate(
                [xb, jnp.zeros((C, HWp - HW), xb.dtype)], axis=1)
        slabs.append(xb)
    x = slabs[0] if B == 1 else jnp.concatenate(slabs, axis=1)            # (C, L)
    x = x.astype(op_dtype)
    zeros = jnp.zeros_like(x)        # hoisted once: JAX does not CSE broadcasts

    # ---- conv-padding validity masks (replace zero-padded image copies) ----
    rc = rc_ref[...]
    row = rc[0:1, :]                 # (1, L)  (q % HWp) // W
    col = rc[1:2, :]                 # (1, L)  (q % HWp) % W
    row_masks, col_masks = [], []
    for kh in range(K):
        lo, hi = p - kh, H + p - kh
        row_masks.append(None if (lo <= 0 and hi >= H)
                         else jnp.logical_and(row >= lo, row < hi))
    for kw in range(K):
        lo, hi = p - kw, W + p - kw
        col_masks.append(None if (lo <= 0 and hi >= W)
                         else jnp.logical_and(col >= lo, col < hi))

    # ---- implicit im2col: XLU lane rotations + grouped MXU contractions ----
    KK = K * K
    acc = None
    for g0 in range(0, KK, taps_per_group):
        g1 = min(KK, g0 + taps_per_group)
        taps = []
        for t in range(g0, g1):
            kh, kw = t // K, t % K
            off = (kh - p) * W + (kw - p)
            tap = x if off == 0 else pltpu.roll(x, shift=(-off) % L, axis=1)
            rm, cm = row_masks[kh], col_masks[kw]
            m = rm if cm is None else (cm if rm is None
                                       else jnp.logical_and(rm, cm))
            if m is not None:
                tap = jnp.where(m, tap, zeros)
            taps.append(tap)
        rhs = taps[0] if len(taps) == 1 else jnp.concatenate(taps, axis=0)
        part = lax.dot_general(w_ref[:, g0 * C:g1 * C], rhs,
                               (((1,), (0,)), ((), ())),
                               preferred_element_type=jnp.float32)
        acc = part if acc is None else acc + part                    # (Cout, L)
    acc = acc + b_ref[...]                                           # bias bcast

    # ---- lane-dense writeback ----------------------------------------------
    if stride == 1 and OW == W:
        # "same" conv: per image the valid outputs are the first OH*OW lanes.
        for b in range(B):
            o_ref[b] = acc[:, b * HWp:b * HWp + OH * OW].astype(o_ref.dtype)
    else:
        # TODO(synk): replace with a precomputed lane-gather + one lane-dense
        # store per image (masked sub-128 stores are a perf cliff); only hit
        # for stride>1 / valid-conv configs.
        for b in range(B):
            for oh in range(OH):
                start = b * HWp + oh * stride * W
                rowv = lax.slice(acc, (0, start),
                                 (acc.shape[0], start + (OW - 1) * stride + 1),
                                 (1, stride))
                o_ref[b, :, pl.ds(oh * OW, OW)] = rowv.astype(o_ref.dtype)


def shift_conv(left, center, right, weight, bias, *, stride, padding,
               fold_div=8, operand_dtype=None, batch_per_step=None):
    """ShiftConv.forward: temporal channel shift followed by Conv2d (NCHW)."""
    n, c, h, w = center.shape
    assert left.shape == center.shape == right.shape
    cout, cin, kh_, kw_ = weight.shape
    assert cin == c and kh_ == kw_
    K = kh_
    fold = c // fold_div
    if fold == 0 or c % fold_div != 0:
        # TODO(synk): support channel counts not divisible by fold_div.
        raise NotImplementedError("in_channels must be a positive multiple of fold_div")

    OH = (h + 2 * padding - K) // stride + 1
    OW = (w + 2 * padding - K) // stride + 1
    if (OW - 1) * stride > w - 1:
        # TODO(synk): padding > (kernel_size-1)//2 needs a wider-pad path.
        raise NotImplementedError("padding wider than (kernel_size-1)//2")

    HW = h * w
    HWp = _round_up(HW, 128)                     # lane-aligned per-image length
    KK = K * K
    op_dtype = jnp.dtype(center.dtype if operand_dtype is None else operand_dtype)

    # Tap grouping: keep one fused contraction only while it still fits a
    # single MXU pass; otherwise accumulate per-group dots (no K*K-replicated
    # image in VMEM).
    taps_per_group = KK if KK * c <= _MXU_CONTRACT else max(1, _MXU_CONTRACT // c)

    # Batch elements per grid step: widen the RHS lanes / DMAs for small
    # feature maps, capped by a rough VMEM budget and by divisibility of n.
    if batch_per_step is None:
        per_img = (_round_up(c, 8) * (taps_per_group + 4)
                   + 2 * _round_up(cout, 8)) * HWp * 4
        cap = max(1, (24 << 20) // max(1, per_img))
        target = min(max(1, 2048 // HWp), cap)
        B = 1
        for d in range(1, n + 1):
            if n % d == 0 and d <= target:
                B = d
    else:
        B = int(batch_per_step)
        assert n % B == 0
    L = B * HWp

    # Free, metadata-only reshapes (no HBM pass).
    r4 = right.reshape(n, fold_div, fold, HW)
    l4 = left.reshape(n, fold_div, fold, HW)
    c3 = center.reshape(n, c, HW)
    q = jnp.arange(L, dtype=jnp.int32) % HWp
    rc = jnp.stack([q // w, q % w], axis=0)                       # (2, L)
    w_col = jnp.transpose(weight, (0, 2, 3, 1)).reshape(cout, KK * c)
    w_col = w_col.astype(op_dtype)
    b2 = bias.reshape(cout, 1).astype(jnp.float32)

    kernel = functools.partial(
        _shift_conv_kernel, fold=fold, H=h, W=w, K=K, stride=stride,
        padding=padding, OH=OH, OW=OW, B=B, HWp=HWp, op_dtype=op_dtype,
        taps_per_group=taps_per_group)

    # Explicit scoped-VMEM budget: double-buffered blocks + in-kernel values,
    # clamped to [32 MiB, 48 MiB] so it is safe on every generation (v7x: 64 MiB
    # physical).  TODO(synk): spatial tiling once a single image exceeds this.
    in_bytes = center.dtype.itemsize
    op_bytes = op_dtype.itemsize
    blk = (2 * 2 * B * _round_up(fold, 8) * _round_up(HW, 128) * in_bytes   # r, l
           + 2 * B * _round_up(c, 8) * _round_up(HW, 128) * in_bytes        # center
           + 2 * 8 * L * 4                                                  # row/col ids
           + 2 * _round_up(cout, 8) * _round_up(KK * c, 128) * op_bytes     # weights
           + 2 * 8 * 128 * 4                                                # bias
           + 2 * B * _round_up(cout, 8) * _round_up(OH * OW, 128) * in_bytes)  # out
    inter = (_round_up(c, 8) * (taps_per_group + 4)
             + 2 * _round_up(cout, 8)) * L * 4
    vmem_limit = int(min(max((blk + inter) * 5 // 4 + (2 << 20), 32 << 20),
                         48 << 20))

    cost = pl.CostEstimate(
        flops=2 * n * OH * OW * KK * c * cout,
        transcendentals=0,
        bytes_accessed=(n * (2 * fold + c) * HW * in_bytes
                        + KK * c * cout * op_bytes + 2 * L * 4
                        + n * cout * OH * OW * in_bytes))

    out_flat = pl.pallas_call(
        kernel,
        out_shape=jax.ShapeDtypeStruct((n, cout, OH * OW), center.dtype),
        grid_spec=pltpu.PrefetchScalarGridSpec(
            num_scalar_prefetch=0,
            grid=(n // B,),
            in_specs=[
                # right channels [0:fold)  -> group 0 of the fold_div axis
                pl.BlockSpec((B, 1, fold, HW), lambda i: (i, 0, 0, 0)),
                # left  channels [fold:2*fold) -> group 1
                pl.BlockSpec((B, 1, fold, HW), lambda i: (i, 1, 0, 0)),
                # center: full channel range (TODO(synk): skip the unused first
                # 2*fold channels via element-offset indexing on the C axis)
                pl.BlockSpec((B, c, HW), lambda i: (i, 0, 0)),
                pl.BlockSpec((2, L), lambda i: (0, 0)),
                pl.BlockSpec((cout, KK * c), lambda i: (0, 0)),
                pl.BlockSpec((cout, 1), lambda i: (0, 0)),
            ],
            out_specs=pl.BlockSpec((B, cout, OH * OW), lambda i: (i, 0, 0)),
        ),
        compiler_params=pltpu.CompilerParams(
            dimension_semantics=("parallel",),
            vmem_limit_bytes=vmem_limit),
        cost_estimate=cost,
    )(r4, l4, c3, rc, w_col, b2)

    return out_flat.reshape(n, cout, OH, OW)      # free reshape back to NCHW


if __name__ == "__main__":
    key = jax.random.PRNGKey(0)
    k1, k2, k3, k4, k5 = jax.random.split(key, 5)

    # Small shapes consistent with the module (C divisible by fold_div=8).
    N, C, H, W = 2, 8, 16, 16
    Cout, K, stride, padding = 4, 3, 1, 1

    left = jax.random.normal(k1, (N, C, H, W), jnp.float32)
    center = jax.random.normal(k2, (N, C, H, W), jnp.float32)
    right = jax.random.normal(k3, (N, C, H, W), jnp.float32)

    def reference(lf, ct, rt, wgt, bs):
        fold = C // 8
        x = jnp.concatenate(
            [rt[:, :fold], lf[:, fold:2 * fold], ct[:, 2 * fold:]], axis=1)
        out = lax.conv_general_dilated(
            x.astype(jnp.float32), wgt.astype(jnp.float32), (stride, stride),
            ((padding, padding), (padding, padding)),
            dimension_numbers=("NCHW", "OIHW", "NCHW"))
        return out + bs.reshape(1, Cout, 1, 1).astype(jnp.float32)

    # 1) Module-default parameters (weight <- ones, bias <- zeros).
    w_ones = jnp.ones((Cout, C, K, K), jnp.float32)
    b_zeros = jnp.zeros((Cout,), jnp.float32)
    out = jax.block_until_ready(
        shift_conv(left, center, right, w_ones, b_zeros,
                   stride=stride, padding=padding))
    ref = reference(left, center, right, w_ones, b_zeros)
    assert out.shape == (N, Cout, H, W)
    assert jnp.allclose(out, ref, atol=1e-3, rtol=1e-3), float(
        jnp.max(jnp.abs(out - ref)))

    # 2) Random weights/bias to catch any layout / tap-ordering bug that
    #    all-ones weights would hide.
    w_rnd = jax.random.normal(k4, (Cout, C, K, K), jnp.float32)
    b_rnd = jax.random.normal(k5, (Cout,), jnp.float32)
    out2 = jax.block_until_ready(
        shift_conv(left, center, right, w_rnd, b_rnd,
                   stride=stride, padding=padding))
    ref2 = reference(left, center, right, w_rnd, b_rnd)
    assert jnp.allclose(out2, ref2, atol=1e-3, rtol=1e-3), float(
        jnp.max(jnp.abs(out2 - ref2)))

    # 3) bf16 operand path (MXU-native operands, f32 accumulation); only the
    #    final bf16 output cast differs from the f32 reference.
    lb, cb, rb = (t.astype(jnp.bfloat16) for t in (left, center, right))
    wb = w_rnd.astype(jnp.bfloat16)
    out3 = jax.block_until_ready(
        shift_conv(lb, cb, rb, wb, b_rnd, stride=stride, padding=padding))
    ref3 = reference(lb, cb, rb, wb, b_rnd)
    assert jnp.allclose(out3.astype(jnp.float32), ref3,
                        atol=1e-1, rtol=5e-2), float(
        jnp.max(jnp.abs(out3.astype(jnp.float32) - ref3)))

    print("KERNEL_OK")
</pallas_src>

<mosaic_0001>
module attributes {stable_mosaic.version = 11 : i64} {
  func.func @_shift_conv_kernel(%arg0: i32, %arg1: memref<2x1x1x256xf32, #tpu.memory_space<vmem>>, %arg2: memref<2x1x1x256xf32, #tpu.memory_space<vmem>>, %arg3: memref<2x8x256xf32, #tpu.memory_space<vmem>>, %arg4: memref<2x512xi32, #tpu.memory_space<vmem>>, %arg5: memref<4x72xf32, #tpu.memory_space<vmem>>, %arg6: memref<4x1xf32, #tpu.memory_space<vmem>>, %arg7: memref<2x4x256xf32, #tpu.memory_space<vmem>>) attributes {dimension_semantics = [#tpu.dimension_semantics<parallel>], iteration_bounds = array<i64: 1>, scalar_prefetch = 0 : i64, scratch_operands = 0 : i64, tpu.core_type = #tpu.core_type<tc>, window_params = [{transform_indices = @transform_0, window_bounds = array<i64: 2, 1, 1, 256>}, {transform_indices = @transform_1, window_bounds = array<i64: 2, 1, 1, 256>}, {transform_indices = @transform_2, window_bounds = array<i64: 2, 8, 256>}, {pipeline_mode = #tpu.pipeline_mode<synchronous>, transform_indices = @transform_3, window_bounds = array<i64: 2, 512>}, {pipeline_mode = #tpu.pipeline_mode<synchronous>, transform_indices = @transform_4, window_bounds = array<i64: 4, 72>}, {pipeline_mode = #tpu.pipeline_mode<synchronous>, transform_indices = @transform_5, window_bounds = array<i64: 4, 1>}, {transform_indices = @transform_6, window_bounds = array<i64: 2, 4, 256>}]} {
    %c0 = arith.constant 0 : index
    %c0_0 = arith.constant 0 : index
    %c0_1 = arith.constant 0 : index
    %c0_2 = arith.constant 0 : index
    %0 = vector.load %arg1[%c0, %c0_0, %c0_1, %c0_2] : memref<2x1x1x256xf32, #tpu.memory_space<vmem>>, vector<1x1x1x256xf32>
    %1 = vector.shape_cast %0 : vector<1x1x1x256xf32> to vector<1x256xf32>
    %c0_3 = arith.constant 0 : index
    %c0_4 = arith.constant 0 : index
    %c0_5 = arith.constant 0 : index
    %c0_6 = arith.constant 0 : index
    %2 = vector.load %arg2[%c0_3, %c0_4, %c0_5, %c0_6] : memref<2x1x1x256xf32, #tpu.memory_space<vmem>>, vector<1x1x1x256xf32>
    %3 = vector.shape_cast %2 : vector<1x1x1x256xf32> to vector<1x256xf32>
    %c0_7 = arith.constant 0 : index
    %c2 = arith.constant 2 : index
    %c0_8 = arith.constant 0 : index
    %4 = vector.load %arg3[%c0_7, %c2, %c0_8] : memref<2x8x256xf32, #tpu.memory_space<vmem>>, vector<1x6x256xf32>
    %5 = vector.shape_cast %4 : vector<1x6x256xf32> to vector<6x256xf32>
    %6 = tpu.concatenate %1, %3, %5 in 0 : vector<1x256xf32>, vector<1x256xf32>, vector<6x256xf32> -> vector<8x256xf32>
    %c1 = arith.constant 1 : index
    %c0_9 = arith.constant 0 : index
    %c0_10 = arith.constant 0 : index
    %c0_11 = arith.constant 0 : index
    %7 = vector.load %arg1[%c1, %c0_9, %c0_10, %c0_11] : memref<2x1x1x256xf32, #tpu.memory_space<vmem>>, vector<1x1x1x256xf32>
    %8 = vector.shape_cast %7 : vector<1x1x1x256xf32> to vector<1x256xf32>
    %c1_12 = arith.constant 1 : index
    %c0_13 = arith.constant 0 : index
    %c0_14 = arith.constant 0 : index
    %c0_15 = arith.constant 0 : index
    %9 = vector.load %arg2[%c1_12, %c0_13, %c0_14, %c0_15] : memref<2x1x1x256xf32, #tpu.memory_space<vmem>>, vector<1x1x1x256xf32>
    %10 = vector.shape_cast %9 : vector<1x1x1x256xf32> to vector<1x256xf32>
    %c1_16 = arith.constant 1 : index
    %c2_17 = arith.constant 2 : index
    %c0_18 = arith.constant 0 : index
    %11 = vector.load %arg3[%c1_16, %c2_17, %c0_18] : memref<2x8x256xf32, #tpu.memory_space<vmem>>, vector<1x6x256xf32>
    %12 = vector.shape_cast %11 : vector<1x6x256xf32> to vector<6x256xf32>
    %13 = tpu.concatenate %8, %10, %12 in 0 : vector<1x256xf32>, vector<1x256xf32>, vector<6x256xf32> -> vector<8x256xf32>
    %14 = tpu.concatenate %6, %13 in 1 : vector<8x256xf32>, vector<8x256xf32> -> vector<8x512xf32>
    %cst = arith.constant 0.000000e+00 : f32
    %15 = vector.broadcast %cst : f32 to vector<8x512xf32>
    %c0_19 = arith.constant 0 : index
    %c0_20 = arith.constant 0 : index
    %16 = vector.load %arg4[%c0_19, %c0_20] : memref<2x512xi32, #tpu.memory_space<vmem>>, vector<2x512xi32>
    %17 = vector.extract_strided_slice %16 {offsets = [0, 0], sizes = [1, 512], strides = [1, 1]} : vector<2x512xi32> to vector<1x512xi32>
    %18 = vector.extract_strided_slice %16 {offsets = [1, 0], sizes = [1, 512], strides = [1, 1]} : vector<2x512xi32> to vector<1x512xi32>
    %c1_i32 = arith.constant 1 : i32
    %19 = vector.broadcast %c1_i32 : i32 to vector<1x512xi32>
    %20 = arith.cmpi sge, %17, %19 : vector<1x512xi32>
    %c17_i32 = arith.constant 17 : i32
    %21 = vector.broadcast %c17_i32 : i32 to vector<1x512xi32>
    %22 = arith.cmpi slt, %17, %21 : vector<1x512xi32>
    %23 = arith.andi %20, %22 : vector<1x512xi1>
    %c-1_i32 = arith.constant -1 : i32
    %24 = vector.broadcast %c-1_i32 : i32 to vector<1x512xi32>
    %25 = arith.cmpi sge, %17, %24 : vector<1x512xi32>
    %c15_i32 = arith.constant 15 : i32
    %26 = vector.broadcast %c15_i32 : i32 to vector<1x512xi32>
    %27 = arith.cmpi slt, %17, %26 : vector<1x512xi32>
    %28 = arith.andi %25, %27 : vector<1x512xi1>
    %c1_i32_21 = arith.constant 1 : i32
    %29 = vector.broadcast %c1_i32_21 : i32 to vector<1x512xi32>
    %30 = arith.cmpi sge, %18, %29 : vector<1x512xi32>
    %c17_i32_22 = arith.constant 17 : i32
    %31 = vector.broadcast %c17_i32_22 : i32 to vector<1x512xi32>
    %32 = arith.cmpi slt, %18, %31 : vector<1x512xi32>
    %33 = arith.andi %30, %32 : vector<1x512xi1>
    %c-1_i32_23 = arith.constant -1 : i32
    %34 = vector.broadcast %c-1_i32_23 : i32 to vector<1x512xi32>
    %35 = arith.cmpi sge, %18, %34 : vector<1x512xi32>
    %c15_i32_24 = arith.constant 15 : i32
    %36 = vector.broadcast %c15_i32_24 : i32 to vector<1x512xi32>
    %37 = arith.cmpi slt, %18, %36 : vector<1x512xi32>
    %38 = arith.andi %35, %37 : vector<1x512xi1>
    %c17_i32_25 = arith.constant 17 : i32
    %39 = tpu.dynamic_rotate %14 by %c17_i32_25 dim 1 : vector<8x512xf32>, i32 -> vector<8x512xf32>
    %40 = arith.andi %23, %33 : vector<1x512xi1>
    %41 = vector.shape_cast %40 : vector<1x512xi1> to vector<1x512xi1>
    %42 = vector.broadcast %41 : vector<1x512xi1> to vector<8x512xi1>
    %43 = arith.select %42, %39, %15 : vector<8x512xi1>, vector<8x512xf32>
    %c16_i32 = arith.constant 16 : i32
    %44 = tpu.dynamic_rotate %14 by %c16_i32 dim 1 : vector<8x512xf32>, i32 -> vector<8x512xf32>
    %45 = vector.shape_cast %23 : vector<1x512xi1> to vector<1x512xi1>
    %46 = vector.broadcast %45 : vector<1x512xi1> to vector<8x512xi1>
    %47 = arith.select %46, %44, %15 : vector<8x512xi1>, vector<8x512xf32>
    %c15_i32_26 = arith.constant 15 : i32
    %48 = tpu.dynamic_rotate %14 by %c15_i32_26 dim 1 : vector<8x512xf32>, i32 -> vector<8x512xf32>
    %49 = arith.andi %23, %38 : vector<1x512xi1>
    %50 = vector.shape_cast %49 : vector<1x512xi1> to vector<1x512xi1>
    %51 = vector.broadcast %50 : vector<1x512xi1> to vector<8x512xi1>
    %52 = arith.select %51, %48, %15 : vector<8x512xi1>, vector<8x512xf32>
    %c1_i32_27 = arith.constant 1 : i32
    %53 = tpu.dynamic_rotate %14 by %c1_i32_27 dim 1 : vector<8x512xf32>, i32 -> vector<8x512xf32>
    %54 = vector.shape_cast %33 : vector<1x512xi1> to vector<1x512xi1>
    %55 = vector.broadcast %54 : vector<1x512xi1> to vector<8x512xi1>
    %56 = arith.select %55, %53, %15 : vector<8x512xi1>, vector<8x512xf32>
    %c511_i32 = arith.constant 511 : i32
    %57 = tpu.dynamic_rotate %14 by %c511_i32 dim 1 : vector<8x512xf32>, i32 -> vector<8x512xf32>
    %58 = vector.shape_cast %38 : vector<1x512xi1> to vector<1x512xi1>
    %59 = vector.broadcast %58 : vector<1x512xi1> to vector<8x512xi1>
    %60 = arith.select %59, %57, %15 : vector<8x512xi1>, vector<8x512xf32>
    %c497_i32 = arith.constant 497 : i32
    %61 = tpu.dynamic_rotate %14 by %c497_i32 dim 1 : vector<8x512xf32>, i32 -> vector<8x512xf32>
    %62 = arith.andi %28, %33 : vector<1x512xi1>
    %63 = vector.shape_cast %62 : vector<1x512xi1> to vector<1x512xi1>
    %64 = vector.broadcast %63 : vector<1x512xi1> to vector<8x512xi1>
    %65 = arith.select %64, %61, %15 : vector<8x512xi1>, vector<8x512xf32>
    %c496_i32 = arith.constant 496 : i32
    %66 = tpu.dynamic_rotate %14 by %c496_i32 dim 1 : vector<8x512xf32>, i32 -> vector<8x512xf32>
    %67 = vector.shape_cast %28 : vector<1x512xi1> to vector<1x512xi1>
    %68 = vector.broadcast %67 : vector<1x512xi1> to vector<8x512xi1>
    %69 = arith.select %68, %66, %15 : vector<8x512xi1>, vector<8x512xf32>
    %c495_i32 = arith.constant 495 : i32
    %70 = tpu.dynamic_rotate %14 by %c495_i32 dim 1 : vector<8x512xf32>, i32 -> vector<8x512xf32>
    %71 = arith.andi %28, %38 : vector<1x512xi1>
    %72 = vector.shape_cast %71 : vector<1x512xi1> to vector<1x512xi1>
    %73 = vector.broadcast %72 : vector<1x512xi1> to vector<8x512xi1>
    %74 = arith.select %73, %70, %15 : vector<8x512xi1>, vector<8x512xf32>
    %75 = tpu.concatenate %43, %47, %52, %56, %14, %60, %65, %69, %74 in 0 : vector<8x512xf32>, vector<8x512xf32>, vector<8x512xf32>, vector<8x512xf32>, vector<8x512xf32>, vector<8x512xf32>, vector<8x512xf32>, vector<8x512xf32>, vector<8x512xf32> -> vector<72x512xf32>
    %c0_28 = arith.constant 0 : index
    %c0_29 = arith.constant 0 : index
    %76 = vector.load %arg5[%c0_28, %c0_29] : memref<4x72xf32, #tpu.memory_space<vmem>>, vector<4x72xf32>
    %cst_30 = arith.constant dense<0.000000e+00> : vector<4x512xf32>
    %77 = tpu.matmul %76, %75, %cst_30 {dimension_numbers = #tpu.dot_dimension_numbers<[1], [0], [0], [1], [0, 0, 1, 1], [], []>} : vector<4x72xf32>, vector<72x512xf32>, vector<4x512xf32> -> vector<4x512xf32>
    %c0_31 = arith.constant 0 : index
    %c0_32 = arith.constant 0 : index
    %78 = vector.load %arg6[%c0_31, %c0_32] : memref<4x1xf32, #tpu.memory_space<vmem>>, vector<4x1xf32>
    %79 = vector.broadcast %78 : vector<4x1xf32> to vector<4x512xf32>
    %80 = arith.addf %77, %79 : vector<4x512xf32>
    %81 = vector.extract_strided_slice %80 {offsets = [0, 0], sizes = [4, 256], strides = [1, 1]} : vector<4x512xf32> to vector<4x256xf32>
    %c0_33 = arith.constant 0 : index
    %c0_34 = arith.constant 0 : index
    %c0_35 = arith.constant 0 : index
    %82 = vector.load %arg7[%c0_33, %c0_34, %c0_35] : memref<2x4x256xf32, #tpu.memory_space<vmem>>, vector<1x4x256xf32>
    %83 = vector.shape_cast %82 : vector<1x4x256xf32> to vector<4x256xf32>
    %84 = vector.shape_cast %81 : vector<4x256xf32> to vector<1x4x256xf32>
    tpu.vector_store %arg7[%c0_33, %c0_34, %c0_35], %84 {strides = array<i32>} : memref<2x4x256xf32, #tpu.memory_space<vmem>>, vector<1x4x256xf32>,
    %85 = vector.extract_strided_slice %80 {offsets = [0, 256], sizes = [4, 256], strides = [1, 1]} : vector<4x512xf32> to vector<4x256xf32>
    %c1_36 = arith.constant 1 : index
    %c0_37 = arith.constant 0 : index
    %c0_38 = arith.constant 0 : index
    %86 = vector.load %arg7[%c1_36, %c0_37, %c0_38] : memref<2x4x256xf32, #tpu.memory_space<vmem>>, vector<1x4x256xf32>
    %87 = vector.shape_cast %86 : vector<1x4x256xf32> to vector<4x256xf32>
    %88 = vector.shape_cast %85 : vector<4x256xf32> to vector<1x4x256xf32>
    tpu.vector_store %arg7[%c1_36, %c0_37, %c0_38], %88 {strides = array<i32>} : memref<2x4x256xf32, #tpu.memory_space<vmem>>, vector<1x4x256xf32>,
    return
  }
  func.func @transform_0(%arg0: i32) -> (i32, i32, i32, i32) {
    %c0_i32 = arith.constant 0 : i32
    %c0_i32_0 = arith.constant 0 : i32
    %c0_i32_1 = arith.constant 0 : i32
    %c0_i32_2 = arith.constant 0 : i32
    return %arg0, %c0_i32, %c0_i32_0, %c0_i32_1 : i32, i32, i32, i32
  }
  func.func @transform_1(%arg0: i32) -> (i32, i32, i32, i32) {
    %c1_i32 = arith.constant 1 : i32
    %c0_i32 = arith.constant 0 : i32
    %c0_i32_0 = arith.constant 0 : i32
    %c0_i32_1 = arith.constant 0 : i32
    return %arg0, %c1_i32, %c0_i32, %c0_i32_0 : i32, i32, i32, i32
  }
  func.func @transform_2(%arg0: i32) -> (i32, i32, i32) {
    %c0_i32 = arith.constant 0 : i32
    %c0_i32_0 = arith.constant 0 : i32
    %c0_i32_1 = arith.constant 0 : i32
    return %arg0, %c0_i32, %c0_i32_0 : i32, i32, i32
  }
  func.func @transform_3(%arg0: i32) -> (i32, i32) {
    %c0_i32 = arith.constant 0 : i32
    %c0_i32_0 = arith.constant 0 : i32
    %c0_i32_1 = arith.constant 0 : i32
    return %c0_i32, %c0_i32_0 : i32, i32
  }
  func.func @transform_4(%arg0: i32) -> (i32, i32) {
    %c0_i32 = arith.constant 0 : i32
    %c0_i32_0 = arith.constant 0 : i32
    %c0_i32_1 = arith.constant 0 : i32
    return %c0_i32, %c0_i32_0 : i32, i32
  }
  func.func @transform_5(%arg0: i32) -> (i32, i32) {
    %c0_i32 = arith.constant 0 : i32
    %c0_i32_0 = arith.constant 0 : i32
    %c0_i32_1 = arith.constant 0 : i32
    return %c0_i32, %c0_i32_0 : i32, i32
  }
  func.func @transform_6(%arg0: i32) -> (i32, i32, i32) {
    %c0_i32 = arith.constant 0 : i32
    %c0_i32_0 = arith.constant 0 : i32
    %c0_i32_1 = arith.constant 0 : i32
    return %arg0, %c0_i32, %c0_i32_0 : i32, i32, i32
  }
}

</mosaic_0001>

<llo_original>
// kernel: tpu_custom_call.1
$region0: #{tpu_custom_call.1}
  #allocation0 [shape = 'u32[]', space=smem, size = 0x4, offset = 0x4, fixed_abs, tag = 'smem constant byte address 0x4 - core index']
  #allocation1 [shape = 'u32[144,128]{1,0:T(1,128)}', space=vmem, size = 0x12000, scoped, tag = 'internal scratch']
  %s0 = inlined_call_operand.hbm [shape: f32[2,8,1,256], index: 0, kind: input, shape index: {}]
  %s1 = inlined_call_operand.hbm [shape: f32[2,8,1,256], index: 1, kind: input, shape index: {}]
  %s2 = inlined_call_operand.hbm [shape: f32[2,8,256], index: 2, kind: input, shape index: {}]
  %s3 = inlined_call_operand.vmem [shape: s32[2,512], index: 3, kind: input, shape index: {}]
  %s4 = inlined_call_operand.vmem [shape: f32[4,72], index: 4, kind: input, shape index: {}]
  %s5 = inlined_call_operand.vmem [shape: f32[4,1], index: 5, kind: input, shape index: {}]
  %s6 = inlined_call_operand.hbm [shape: f32[2,4,256], index: 6, kind: output, shape index: {}]
  %s7 = sld [smem:[#allocation0]]
  $region46: #{tpu_custom_call.1} parent=0
    _
  %s9 = ssub.s32 1, %s7
  %s10 = scalar_select 0, %s9, %s7
  $region1: #{tpu_custom_call.1} parent=0
    #allocation2 [shape = 'u8[2048]{0}', space=vmem, size = 0x800, scoped, tag = 'input window, operand 0, single buffered']
    #allocation3 [shape = 's32[1]{0}', space=sflag, size = 0x4, scoped, tag = 'scoped memory for tpu_custom_call.1']
    #allocation4 [shape = 's32[1]{0}', space=sflag, size = 0x4, scoped, tag = 'scoped memory for tpu_custom_call.1']
    #allocation5 [shape = 'u8[2048]{0}', space=vmem, size = 0x800, scoped, tag = 'input window, operand 1, single buffered']
    #allocation6 [shape = 's32[1]{0}', space=sflag, size = 0x4, scoped, tag = 'scoped memory for tpu_custom_call.1']
    #allocation7 [shape = 'u8[16384]{0}', space=vmem, size = 0x4000, scoped, tag = 'input window, operand 2, single buffered']
    #allocation8 [shape = 'u8[8192]{0}', space=vmem, size = 0x2000, scoped, tag = 'output window, operand 0, single buffered']
    %11 = vsyncpa [#allocation3], 0
    %12 = vsyncpa [#allocation6], 0
    %13 = vsyncpa [#allocation4], 0
    // Predicated region
    $region2: #{tpu_custom_call.1} parent=1 // pred_check
      _
    $region3: #{tpu_custom_call.1} parent=1 // pred_check_branch
      %15 = sbr.rel (0) target = $region5
    $region4: #{tpu_custom_call.1} parent=1 // pred_region
      %s17 = ssub.s32 64, 64
      %18 = vsyncadd [#allocation3], %s17
      %s19 = sshll.u32 [#allocation2], 4
      %s20 = int_to_ptr.vmem [resolvable:$true] %s19
      %25 = dma.hbm_to_vmem [thread:$0]  %s0, 64, %s20, [#allocation3], 256, 32, 2
    $region5: #{tpu_custom_call.1} parent=1 // pred_fallthru
      _
    // Predicated region
    $region6: #{tpu_custom_call.1} parent=1 // pred_check
      _
    $region7: #{tpu_custom_call.1} parent=1 // pred_check_branch
      %27 = sbr.rel (0) target = $region9
    $region8: #{tpu_custom_call.1} parent=1 // pred_region
      %s29 = ssub.s32 64, 64
      %30 = vsyncadd [#allocation6], %s29
      %s31 = scalar_lea.hbm %s1, 32
      %s32 = sshll.u32 [#allocation5], 4
      %s33 = int_to_ptr.vmem [resolvable:$true] %s32
      %38 = dma.hbm_to_vmem [thread:$0]  %s31, 64, %s33, [#allocation6], 256, 32, 2
    $region9: #{tpu_custom_call.1} parent=1 // pred_fallthru
      _
    // Predicated region
    $region10: #{tpu_custom_call.1} parent=1 // pred_check
      _
    $region11: #{tpu_custom_call.1} parent=1 // pred_check_branch
      %40 = sbr.rel (0) target = $region13
    $region12: #{tpu_custom_call.1} parent=1 // pred_region
      %s42 = ssub.s32 512, 512
      %43 = vsyncadd [#allocation6], %s42
      %s44 = sshll.u32 [#allocation7], 4
      %s45 = int_to_ptr.vmem [resolvable:$true] %s44
      %50 = dma.hbm_to_vmem [thread:$0]  %s2, 512, %s45, [#allocation6], 256, 256, 16
    $region13: #{tpu_custom_call.1} parent=1 // pred_fallthru
      _
    // Predicated region
    $region14: #{tpu_custom_call.1} parent=1 // pred_check
      _
    $region15: #{tpu_custom_call.1} parent=1 // pred_check_branch
      %52 = sbr.rel (0) target = $region17
    $region16: #{tpu_custom_call.1} parent=1 // pred_region
      _
    $region17: #{tpu_custom_call.1} parent=1 // pred_fallthru
      _
    // Predicated region
    $region18: #{tpu_custom_call.1} parent=1 // pred_check
      _
    $region19: #{tpu_custom_call.1} parent=1 // pred_check_branch
      %54 = sbr.rel (0) target = $region21
    $region20: #{tpu_custom_call.1} parent=1 // pred_region
      _
    $region21: #{tpu_custom_call.1} parent=1 // pred_fallthru
      _
    // Predicated region
    $region22: #{tpu_custom_call.1} parent=1 // pred_check
      _
    $region23: #{tpu_custom_call.1} parent=1 // pred_check_branch
      %56 = sbr.rel (0) target = $region25
    $region24: #{tpu_custom_call.1} parent=1 // pred_region
      _
    $region25: #{tpu_custom_call.1} parent=1 // pred_fallthru
      _
    // Predicated region
    $region26: #{tpu_custom_call.1} parent=1 // pred_check
      _
    $region27: #{tpu_custom_call.1} parent=1 // pred_check_branch
      %58 = sbr.rel (0) target = $region29
    $region28: #{tpu_custom_call.1} parent=1 // pred_region
      %59 = dma.done [#allocation3], 64
    $region29: #{tpu_custom_call.1} parent=1 // pred_fallthru
      _
    // Predicated region
    $region30: #{tpu_custom_call.1} parent=1 // pred_check
      _
    $region31: #{tpu_custom_call.1} parent=1 // pred_check_branch
      %61 = sbr.rel (0) target = $region33
    $region32: #{tpu_custom_call.1} parent=1 // pred_region
      %62 = dma.done [#allocation6], 64
    $region33: #{tpu_custom_call.1} parent=1 // pred_fallthru
      _
    // Predicated region
    $region34: #{tpu_custom_call.1} parent=1 // pred_check
      _
    $region35: #{tpu_custom_call.1} parent=1 // pred_check_branch
      %64 = sbr.rel (0) target = $region37
    $region36: #{tpu_custom_call.1} parent=1 // pred_region
      %65 = dma.done [#allocation6], 512
    $region37: #{tpu_custom_call.1} parent=1 // pred_fallthru
      _
    %v66 = vld [vmem:[#allocation2] sm:$0x3]
    %v67 = vld [vmem:[#allocation5] sm:$0x3]
    %v68 = vld [vmem:[#allocation7] sm:$0xfc]
    %v69 = vld [vmem:[#allocation7 + $0x8] sm:$0xfc]
    %v71 = vlaneseq
    %v72 = vshrl.u32 %v71, 7
    %v73 = vsub.s32 0, %v72
    %v74 = vrot.slane %v66, %v73
    %v75 = vlaneseq
    %v76 = vshrl.u32 %v75, 7
    %v77 = vsub.s32 1, %v76
    %v78 = vrot.slane %v66, %v77
    %v82 = vlaneseq
    %v83 = vshrl.u32 %v82, 7
    %v84 = vsub.s32 0, %v83
    %v85 = vrot.slane %v67, %v84
    %v86 = vlaneseq
    %v87 = vshrl.u32 %v86, 7
    %v88 = vsub.s32 1, %v87
    %v89 = vrot.slane %v67, %v88
    %vm92 = vcmask 1040384
    %v93 = vsel %vm92, %v74, %v85
    %v94 = vsel %vm92, %v78, %v89
    %vm95 = vcmask 1041408
    %v96 = vsel %vm95, %v93, %v68
    %v97 = vsel %vm95, %v94, %v69
    %s98 = scalar_lea.vmem [#allocation2], 2
    %v99 = vld [vmem:[%s98] sm:$0x3]
    %s100 = scalar_lea.vmem [#allocation5], 2
    %v101 = vld [vmem:[%s100] sm:$0x3]
    %s102 = scalar_lea.vmem [#allocation7], 16
    %v103 = vld [vmem:[%s102] sm:$0xfc]
    %v104 = vld [vmem:[%s102 + $0x8] sm:$0xfc]
    %v106 = vlaneseq
    %v107 = vshrl.u32 %v106, 7
    %v108 = vsub.s32 0, %v107
    %v109 = vrot.slane %v99, %v108
    %v110 = vlaneseq
    %v111 = vshrl.u32 %v110, 7
    %v112 = vsub.s32 1, %v111
    %v113 = vrot.slane %v99, %v112
    %v117 = vlaneseq
    %v118 = vshrl.u32 %v117, 7
    %v119 = vsub.s32 0, %v118
    %v120 = vrot.slane %v101, %v119
    %v121 = vlaneseq
    %v122 = vshrl.u32 %v121, 7
    %v123 = vsub.s32 1, %v122
    %v124 = vrot.slane %v101, %v123
    %v127 = vsel %vm92, %v109, %v120
    %v128 = vsel %vm92, %v113, %v124
    %v129 = vsel %vm95, %v127, %v103
    %v130 = vsel %vm95, %v128, %v104
    %v131 = vld [vmem:[%s3] sm:$0xff]
    %vm132 = vcmp.ge.s32.totalorder %v131, 1
    %vm133 = vcmp.lt.s32.totalorder %v131, 17
    %vm134 = vmand %vm132, %vm133
    %vm135 = vcmp.ge.s32.totalorder %v131, 4294967295
    %vm136 = vcmp.lt.s32.totalorder %v131, 15
    %vm137 = vmand %vm135, %vm136
    %138 = vrot.lane.b32.xlu0 %v96, 17
    %v139 = vpop.permute.xlu0 %138
    %140 = vrot.lane.b32.xlu0 %v97, 17
    %v141 = vpop.permute.xlu0 %140
    %142 = vrot.lane.b32.xlu0 %v129, 17
    %v143 = vpop.permute.xlu0 %142
    %144 = vrot.lane.b32.xlu0 %v130, 17
    %v145 = vpop.permute.xlu0 %144
    %v146 = vlaneseq
    %v147 = vand.u32 %v146, 127
    %vm148 = vcmp.lt.s32.totalorder %v147, 17
    %v149 = vsel %vm148, %v143, %v145
    %v150 = vsel %vm148, %v141, %v143
    %v151 = vsel %vm148, %v139, %v141
    %v152 = vsel %vm148, %v145, %v139
    %v153 = vsel %vm134, 1, 0
    %v154 = vrot.slane %v153, 7
    %v155 = vrot.slane %v154, 2
    %vm156 = vcmp.ne.s32.totalorder %v155, 0
    %vm157 = vmand %vm134, %vm156
    %v158 = vsel %vm157, 1, 0
    %v159 = vlaneseq
    %v160 = vshrl.u32 %v159, 7
    %v161 = vsub.s32 0, %v160
    %v162 = vrot.slane %v158, %v161
    %v163 = vlaneseq
    %v164 = vshrl.u32 %v163, 7
    %v165 = vsub.s32 2, %v164
    %v166 = vrot.slane %v158, %v165
    %v167 = vlaneseq
    %v168 = vshrl.u32 %v167, 7
    %v169 = vsub.s32 4, %v168
    %v170 = vrot.slane %v158, %v169
    %v171 = vlaneseq
    %v172 = vshrl.u32 %v171, 7
    %v173 = vsub.s32 6, %v172
    %v174 = vrot.slane %v158, %v173
    %v175 = vlaneseq
    %v176 = vshrl.u32 %v175, 7
    %v177 = vsub.s32 0, %v176
    %v178 = vrot.slane %v162, %v177
    %v179 = vlaneseq
    %v180 = vshrl.u32 %v179, 7
    %v181 = vsub.s32 0, %v180
    %v182 = vrot.slane %v166, %v181
    %v183 = vlaneseq
    %v184 = vshrl.u32 %v183, 7
    %v185 = vsub.s32 0, %v184
    %v186 = vrot.slane %v170, %v185
    %v187 = vlaneseq
    %v188 = vshrl.u32 %v187, 7
    %v189 = vsub.s32 0, %v188
    %v190 = vrot.slane %v174, %v189
    %vm191 = vcmp.eq.s32.totalorder %v178, 1
    %vm192 = vcmp.eq.s32.totalorder %v182, 1
    %vm193 = vcmp.eq.s32.totalorder %v186, 1
    %vm194 = vcmp.eq.s32.totalorder %v190, 1
    %v195 = vsel %vm191, %v152, 0.0
    %v196 = vsel %vm192, %v151, 0.0
    %v197 = vsel %vm193, %v150, 0.0
    %v198 = vsel %vm194, %v149, 0.0
    %199 = vrot.lane.b32.xlu0 %v96, 16
    %v200 = vpop.permute.xlu0 %199
    %201 = vrot.lane.b32.xlu0 %v97, 16
    %v202 = vpop.permute.xlu0 %201
    %203 = vrot.lane.b32.xlu0 %v129, 16
    %v204 = vpop.permute.xlu0 %203
    %205 = vrot.lane.b32.xlu0 %v130, 16
    %v206 = vpop.permute.xlu0 %205
    %vm207 = vcmp.lt.s32.totalorder %v147, 16
    %v208 = vsel %vm207, %v204, %v206
    %v209 = vsel %vm207, %v202, %v204
    %v210 = vsel %vm207, %v200, %v202
    %v211 = vsel %vm207, %v206, %v200
    %v212 = vlaneseq
    %v213 = vshrl.u32 %v212, 7
    %v214 = vsub.s32 0, %v213
    %v215 = vrot.slane %v153, %v214
    %v216 = vlaneseq
    %v217 = vshrl.u32 %v216, 7
    %v218 = vsub.s32 2, %v217
    %v219 = vrot.slane %v153, %v218
    %v220 = vlaneseq
    %v221 = vshrl.u32 %v220, 7
    %v222 = vsub.s32 4, %v221
    %v223 = vrot.slane %v153, %v222
    %v224 = vlaneseq
    %v225 = vshrl.u32 %v224, 7
    %v226 = vsub.s32 6, %v225
    %v227 = vrot.slane %v153, %v226
    %v228 = vlaneseq
    %v229 = vshrl.u32 %v228, 7
    %v230 = vsub.s32 0, %v229
    %v231 = vrot.slane %v215, %v230
    %v232 = vlaneseq
    %v233 = vshrl.u32 %v232, 7
    %v234 = vsub.s32 0, %v233
    %v235 = vrot.slane %v219, %v234
    %v236 = vlaneseq
    %v237 = vshrl.u32 %v236, 7
    %v238 = vsub.s32 0, %v237
    %v239 = vrot.slane %v223, %v238
    %v240 = vlaneseq
    %v241 = vshrl.u32 %v240, 7
    %v242 = vsub.s32 0, %v241
    %v243 = vrot.slane %v227, %v242
    %vm244 = vcmp.eq.s32.totalorder %v231, 1
    %vm245 = vcmp.eq.s32.totalorder %v235, 1
    %vm246 = vcmp.eq.s32.totalorder %v239, 1
    %vm247 = vcmp.eq.s32.totalorder %v243, 1
    %v248 = vsel %vm244, %v211, 0.0
    %v249 = vsel %vm245, %v210, 0.0
    %v250 = vsel %vm246, %v209, 0.0
    %v251 = vsel %vm247, %v208, 0.0
    %252 = vrot.lane.b32.xlu0 %v96, 15
    %v253 = vpop.permute.xlu0 %252
    %254 = vrot.lane.b32.xlu0 %v97, 15
    %v255 = vpop.permute.xlu0 %254
    %256 = vrot.lane.b32.xlu0 %v129, 15
    %v257 = vpop.permute.xlu0 %256
    %258 = vrot.lane.b32.xlu0 %v130, 15
    %v259 = vpop.permute.xlu0 %258
    %vm260 = vcmp.lt.s32.totalorder %v147, 15
    %v261 = vsel %vm260, %v257, %v259
    %v262 = vsel %vm260, %v255, %v257
    %v263 = vsel %vm260, %v253, %v255
    %v264 = vsel %vm260, %v259, %v253
    %v265 = vsel %vm137, 1, 0
    %v266 = vrot.slane %v265, 7
    %v267 = vrot.slane %v266, 2
    %vm268 = vcmp.ne.s32.totalorder %v267, 0
    %vm269 = vmand %vm134, %vm268
    %v270 = vsel %vm269, 1, 0
    %v271 = vlaneseq
    %v272 = vshrl.u32 %v271, 7
    %v273 = vsub.s32 0, %v272
    %v274 = vrot.slane %v270, %v273
    %v275 = vlaneseq
    %v276 = vshrl.u32 %v275, 7
    %v277 = vsub.s32 2, %v276
    %v278 = vrot.slane %v270, %v277
    %v279 = vlaneseq
    %v280 = vshrl.u32 %v279, 7
    %v281 = vsub.s32 4, %v280
    %v282 = vrot.slane %v270, %v281
    %v283 = vlaneseq
    %v284 = vshrl.u32 %v283, 7
    %v285 = vsub.s32 6, %v284
    %v286 = vrot.slane %v270, %v285
    %v287 = vlaneseq
    %v288 = vshrl.u32 %v287, 7
    %v289 = vsub.s32 0, %v288
    %v290 = vrot.slane %v274, %v289
    %v291 = vlaneseq
    %v292 = vshrl.u32 %v291, 7
    %v293 = vsub.s32 0, %v292
    %v294 = vrot.slane %v278, %v293
    %v295 = vlaneseq
    %v296 = vshrl.u32 %v295, 7
    %v297 = vsub.s32 0, %v296
    %v298 = vrot.slane %v282, %v297
    %v299 = vlaneseq
    %v300 = vshrl.u32 %v299, 7
    %v301 = vsub.s32 0, %v300
    %v302 = vrot.slane %v286, %v301
    %vm303 = vcmp.eq.s32.totalorder %v290, 1
    %vm304 = vcmp.eq.s32.totalorder %v294, 1
    %vm305 = vcmp.eq.s32.totalorder %v298, 1
    %vm306 = vcmp.eq.s32.totalorder %v302, 1
    %v307 = vsel %vm303, %v264, 0.0
    %v308 = vsel %vm304, %v263, 0.0
    %v309 = vsel %vm305, %v262, 0.0
    %v310 = vsel %vm306, %v261, 0.0
    %311 = vrot.lane.b32.xlu0 %v96, 1
    %v312 = vpop.permute.xlu0 %311
    %313 = vrot.lane.b32.xlu0 %v97, 1
    %v314 = vpop.permute.xlu0 %313
    %315 = vrot.lane.b32.xlu0 %v129, 1
    %v316 = vpop.permute.xlu0 %315
    %317 = vrot.lane.b32.xlu0 %v130, 1
    %v318 = vpop.permute.xlu0 %317
    %vm319 = vcmp.lt.s32.totalorder %v147, 1
    %v320 = vsel %vm319, %v316, %v318
    %v321 = vsel %vm319, %v314, %v316
    %v322 = vsel %vm319, %v312, %v314
    %v323 = vsel %vm319, %v318, %v312
    %v324 = vlaneseq
    %v325 = vshrl.u32 %v324, 7
    %v326 = vsub.s32 1, %v325
    %v327 = vrot.slane %v153, %v326
    %v328 = vlaneseq
    %v329 = vshrl.u32 %v328, 7
    %v330 = vsub.s32 3, %v329
    %v331 = vrot.slane %v153, %v330
    %v332 = vlaneseq
    %v333 = vshrl.u32 %v332, 7
    %v334 = vsub.s32 5, %v333
    %v335 = vrot.slane %v153, %v334
    %v336 = vlaneseq
    %v337 = vshrl.u32 %v336, 7
    %v338 = vsub.s32 7, %v337
    %v339 = vrot.slane %v153, %v338
    %v340 = vlaneseq
    %v341 = vshrl.u32 %v340, 7
    %v342 = vsub.s32 1, %v341
    %v343 = vrot.slane %v327, %v342
    %v344 = vlaneseq
    %v345 = vshrl.u32 %v344, 7
    %v346 = vsub.s32 1, %v345
    %v347 = vrot.slane %v331, %v346
    %v348 = vlaneseq
    %v349 = vshrl.u32 %v348, 7
    %v350 = vsub.s32 1, %v349
    %v351 = vrot.slane %v335, %v350
    %v352 = vlaneseq
    %v353 = vshrl.u32 %v352, 7
    %v354 = vsub.s32 1, %v353
    %v355 = vrot.slane %v339, %v354
    %vm356 = vcmp.eq.s32.totalorder %v343, 1
    %vm357 = vcmp.eq.s32.totalorder %v347, 1
    %vm358 = vcmp.eq.s32.totalorder %v351, 1
    %vm359 = vcmp.eq.s32.totalorder %v355, 1
    %v360 = vsel %vm356, %v323, 0.0
    %v361 = vsel %vm357, %v322, 0.0
    %v362 = vsel %vm358, %v321, 0.0
    %v363 = vsel %vm359, %v320, 0.0
    %364 = vrot.lane.b32.xlu0 %v96, 127
    %v365 = vpop.permute.xlu0 %364
    %366 = vrot.lane.b32.xlu0 %v97, 127
    %v367 = vpop.permute.xlu0 %366
    %368 = vrot.lane.b32.xlu0 %v129, 127
    %v369 = vpop.permute.xlu0 %368
    %370 = vrot.lane.b32.xlu0 %v130, 127
    %v371 = vpop.permute.xlu0 %370
    %vm372 = vcmp.lt.s32.totalorder %v147, 127
    %v373 = vsel %vm372, %v369, %v371
    %v374 = vsel %vm372, %v367, %v369
    %v375 = vsel %vm372, %v365, %v367
    %v376 = vsel %vm372, %v371, %v365
    %v377 = vlaneseq
    %v378 = vshrl.u32 %v377, 7
    %v379 = vsub.s32 1, %v378
    %v380 = vrot.slane %v265, %v379
    %v381 = vlaneseq
    %v382 = vshrl.u32 %v381, 7
    %v383 = vsub.s32 3, %v382
    %v384 = vrot.slane %v265, %v383
    %v385 = vlaneseq
    %v386 = vshrl.u32 %v385, 7
    %v387 = vsub.s32 5, %v386
    %v388 = vrot.slane %v265, %v387
    %v389 = vlaneseq
    %v390 = vshrl.u32 %v389, 7
    %v391 = vsub.s32 7, %v390
    %v392 = vrot.slane %v265, %v391
    %v393 = vlaneseq
    %v394 = vshrl.u32 %v393, 7
    %v395 = vsub.s32 1, %v394
    %v396 = vrot.slane %v380, %v395
    %v397 = vlaneseq
    %v398 = vshrl.u32 %v397, 7
    %v399 = vsub.s32 1, %v398
    %v400 = vrot.slane %v384, %v399
    %v401 = vlaneseq
    %v402 = vshrl.u32 %v401, 7
    %v403 = vsub.s32 1, %v402
    %v404 = vrot.slane %v388, %v403
    %v405 = vlaneseq
    %v406 = vshrl.u32 %v405, 7
    %v407 = vsub.s32 1, %v406
    %v408 = vrot.slane %v392, %v407
    %vm409 = vcmp.eq.s32.totalorder %v396, 1
    %vm410 = vcmp.eq.s32.totalorder %v400, 1
    %vm411 = vcmp.eq.s32.totalorder %v404, 1
    %vm412 = vcmp.eq.s32.totalorder %v408, 1
    %v413 = vsel %vm409, %v375, 0.0
    %v414 = vsel %vm410, %v374, 0.0
    %v415 = vsel %vm411, %v373, 0.0
    %v416 = vsel %vm412, %v376, 0.0
    %417 = vrot.lane.b32.xlu0 %v96, 113
    %v418 = vpop.permute.xlu0 %417
    %419 = vrot.lane.b32.xlu0 %v97, 113
    %v420 = vpop.permute.xlu0 %419
    %421 = vrot.lane.b32.xlu0 %v129, 113
    %v422 = vpop.permute.xlu0 %421
    %423 = vrot.lane.b32.xlu0 %v130, 113
    %v424 = vpop.permute.xlu0 %423
    %vm425 = vcmp.lt.s32.totalorder %v147, 113
    %v426 = vsel %vm425, %v422, %v424
    %v427 = vsel %vm425, %v420, %v422
    %v428 = vsel %vm425, %v418, %v420
    %v429 = vsel %vm425, %v424, %v418
    %vm430 = vmand %vm137, %vm156
    %v431 = vsel %vm430, 1, 0
    %v432 = vlaneseq
    %v433 = vshrl.u32 %v432, 7
    %v434 = vsub.s32 0, %v433
    %v435 = vrot.slane %v431, %v434
    %v436 = vlaneseq
    %v437 = vshrl.u32 %v436, 7
    %v438 = vsub.s32 2, %v437
    %v439 = vrot.slane %v431, %v438
    %v440 = vlaneseq
    %v441 = vshrl.u32 %v440, 7
    %v442 = vsub.s32 4, %v441
    %v443 = vrot.slane %v431, %v442
    %v444 = vlaneseq
    %v445 = vshrl.u32 %v444, 7
    %v446 = vsub.s32 6, %v445
    %v447 = vrot.slane %v431, %v446
    %v448 = vlaneseq
    %v449 = vshrl.u32 %v448, 7
    %v450 = vsub.s32 0, %v449
    %v451 = vrot.slane %v435, %v450
    %v452 = vlaneseq
    %v453 = vshrl.u32 %v452, 7
    %v454 = vsub.s32 0, %v453
    %v455 = vrot.slane %v439, %v454
    %v456 = vlaneseq
    %v457 = vshrl.u32 %v456, 7
    %v458 = vsub.s32 0, %v457
    %v459 = vrot.slane %v443, %v458
    %v460 = vlaneseq
    %v461 = vshrl.u32 %v460, 7
    %v462 = vsub.s32 0, %v461
    %v463 = vrot.slane %v447, %v462
    %vm464 = vcmp.eq.s32.totalorder %v451, 1
    %vm465 = vcmp.eq.s32.totalorder %v455, 1
    %vm466 = vcmp.eq.s32.totalorder %v459, 1
    %vm467 = vcmp.eq.s32.totalorder %v463, 1
    %v468 = vsel %vm464, %v428, 0.0
    %v469 = vsel %vm465, %v427, 0.0
    %v470 = vsel %vm466, %v426, 0.0
    %v471 = vsel %vm467, %v429, 0.0
    %472 = vrot.lane.b32.xlu0 %v96, 112
    %v473 = vpop.permute.xlu0 %472
    %474 = vrot.lane.b32.xlu0 %v97, 112
    %v475 = vpop.permute.xlu0 %474
    %476 = vrot.lane.b32.xlu0 %v129, 112
    %v477 = vpop.permute.xlu0 %476
    %478 = vrot.lane.b32.xlu0 %v130, 112
    %v479 = vpop.permute.xlu0 %478
    %vm480 = vcmp.lt.s32.totalorder %v147, 112
    %v481 = vsel %vm480, %v477, %v479
    %v482 = vsel %vm480, %v475, %v477
    %v483 = vsel %vm480, %v473, %v475
    %v484 = vsel %vm480, %v479, %v473
    %v485 = vlaneseq
    %v486 = vshrl.u32 %v485, 7
    %v487 = vsub.s32 0, %v486
    %v488 = vrot.slane %v265, %v487
    %v489 = vlaneseq
    %v490 = vshrl.u32 %v489, 7
    %v491 = vsub.s32 2, %v490
    %v492 = vrot.slane %v265, %v491
    %v493 = vlaneseq
    %v494 = vshrl.u32 %v493, 7
    %v495 = vsub.s32 4, %v494
    %v496 = vrot.slane %v265, %v495
    %v497 = vlaneseq
    %v498 = vshrl.u32 %v497, 7
    %v499 = vsub.s32 6, %v498
    %v500 = vrot.slane %v265, %v499
    %v501 = vlaneseq
    %v502 = vshrl.u32 %v501, 7
    %v503 = vsub.s32 0, %v502
    %v504 = vrot.slane %v488, %v503
    %v505 = vlaneseq
    %v506 = vshrl.u32 %v505, 7
    %v507 = vsub.s32 0, %v506
    %v508 = vrot.slane %v492, %v507
    %v509 = vlaneseq
    %v510 = vshrl.u32 %v509, 7
    %v511 = vsub.s32 0, %v510
    %v512 = vrot.slane %v496, %v511
    %v513 = vlaneseq
    %v514 = vshrl.u32 %v513, 7
    %v515 = vsub.s32 0, %v514
    %v516 = vrot.slane %v500, %v515
    %vm517 = vcmp.eq.s32.totalorder %v504, 1
    %vm518 = vcmp.eq.s32.totalorder %v508, 1
    %vm519 = vcmp.eq.s32.totalorder %v512, 1
    %vm520 = vcmp.eq.s32.totalorder %v516, 1
    %v521 = vsel %vm517, %v483, 0.0
    %v522 = vsel %vm518, %v482, 0.0
    %v523 = vsel %vm519, %v481, 0.0
    %v524 = vsel %vm520, %v484, 0.0
    %525 = vrot.lane.b32.xlu0 %v96, 111
    %v526 = vpop.permute.xlu0 %525
    %527 = vrot.lane.b32.xlu0 %v97, 111
    %v528 = vpop.permute.xlu0 %527
    %529 = vrot.lane.b32.xlu0 %v129, 111
    %v530 = vpop.permute.xlu0 %529
    %531 = vrot.lane.b32.xlu0 %v130, 111
    %v532 = vpop.permute.xlu0 %531
    %vm533 = vcmp.lt.s32.totalorder %v147, 111
    %v534 = vsel %vm533, %v530, %v532
    %v535 = vsel %vm533, %v528, %v530
    %v536 = vsel %vm533, %v526, %v528
    %v537 = vsel %vm533, %v532, %v526
    %vm538 = vmand %vm137, %vm268
    %v539 = vsel %vm538, 1, 0
    %v540 = vlaneseq
    %v541 = vshrl.u32 %v540, 7
    %v542 = vsub.s32 0, %v541
    %v543 = vrot.slane %v539, %v542
    %v544 = vlaneseq
    %v545 = vshrl.u32 %v544, 7
    %v546 = vsub.s32 2, %v545
    %v547 = vrot.slane %v539, %v546
    %v548 = vlaneseq
    %v549 = vshrl.u32 %v548, 7
    %v550 = vsub.s32 4, %v549
    %v551 = vrot.slane %v539, %v550
    %v552 = vlaneseq
    %v553 = vshrl.u32 %v552, 7
    %v554 = vsub.s32 6, %v553
    %v555 = vrot.slane %v539, %v554
    %v556 = vlaneseq
    %v557 = vshrl.u32 %v556, 7
    %v558 = vsub.s32 0, %v557
    %v559 = vrot.slane %v543, %v558
    %v560 = vlaneseq
    %v561 = vshrl.u32 %v560, 7
    %v562 = vsub.s32 0, %v561
    %v563 = vrot.slane %v547, %v562
    %v564 = vlaneseq
    %v565 = vshrl.u32 %v564, 7
    %v566 = vsub.s32 0, %v565
    %v567 = vrot.slane %v551, %v566
    %v568 = vlaneseq
    %v569 = vshrl.u32 %v568, 7
    %v570 = vsub.s32 0, %v569
    %v571 = vrot.slane %v555, %v570
    %vm572 = vcmp.eq.s32.totalorder %v559, 1
    %vm573 = vcmp.eq.s32.totalorder %v563, 1
    %vm574 = vcmp.eq.s32.totalorder %v567, 1
    %vm575 = vcmp.eq.s32.totalorder %v571, 1
    %v576 = vsel %vm572, %v536, 0.0
    %v577 = vsel %vm573, %v535, 0.0
    %v578 = vsel %vm574, %v534, 0.0
    %v579 = vsel %vm575, %v537, 0.0
    %v580 = vld [vmem:[%s4] sm:$0xf]
    %v581 = vld [vmem:[%s5] sm:$0xf]
    %583 = vset.pattern.permute.xlu0 0
    %584 = vperm.xlu0 %583, %v581
    %v585 = vpop.permute.xlu0 %584
    %vm587 = vcmask 588800
    %v589 = vsel %vm587, %v580, 0
    %591 = vmatprep.subr.mxu0 0.0
    %592 = vmatpush1.msra.mxu0 0.0
    %593 = vmatprep.subr.mxu0 0.0
    %594 = vmatpush1.msra.mxu0 0.0
    %595 = vmatprep.subr.mxu0 0.0
    %596 = vmatpush1.msra.mxu0 0.0
    %597 = vmatprep.subr.mxu0 0.0
    %598 = vmatpush1.msra.mxu0 0.0
    %599 = vmatprep.subr.mxu0 0.0
    %600 = vmatpush1.msra.mxu0 0.0
    %601 = vmatprep.subr.mxu0 0.0
    %602 = vmatpush1.msra.mxu0 0.0
    %603 = vmatprep.subr.mxu0 0.0
    %604 = vmatpush1.msra.mxu0 0.0
    %605 = vmatprep.subr.mxu0 %v577
    %606 = vmatpush1.msra.mxu0 %v576
    %607 = vmatprep.subr.mxu0 %v522
    %608 = vmatpush1.msra.mxu0 %v521
    %609 = vmatprep.subr.mxu0 %v469
    %610 = vmatpush1.msra.mxu0 %v468
    %611 = vmatprep.subr.mxu0 %v414
    %612 = vmatpush1.msra.mxu0 %v413
    %613 = vmatprep.subr.mxu0 %v97
    %614 = vmatpush1.msra.mxu0 %v96
    %615 = vmatprep.subr.mxu0 %v361
    %616 = vmatpush1.msra.mxu0 %v360
    %617 = vmatprep.subr.mxu0 %v308
    %618 = vmatpush1.msra.mxu0 %v307
    %619 = vmatprep.subr.mxu0 %v249
    %620 = vmatpush1.msra.mxu0 %v248
    %621 = vmatprep.subr.mxu0 %v196
    %622 = vmatpush1.msra.mxu0 %v195
    %623 = vmatprep.subr.mxu0 0.0
    %624 = vmatpush2.msra.mxu0 0.0
    %625 = vmatprep.subr.mxu0 0.0
    %626 = vmatpush2.msra.mxu0 0.0
    %627 = vmatprep.subr.mxu0 0.0
    %628 = vmatpush2.msra.mxu0 0.0
    %629 = vmatprep.subr.mxu0 0.0
    %630 = vmatpush2.msra.mxu0 0.0
    %631 = vmatprep.subr.mxu0 0.0
    %632 = vmatpush2.msra.mxu0 0.0
    %633 = vmatprep.subr.mxu0 0.0
    %634 = vmatpush2.msra.mxu0 0.0
    %635 = vmatprep.subr.mxu0 0.0
    %636 = vmatpush2.msra.mxu0 0.0
    %637 = vmatprep.subr.mxu0 0.0
    %638 = vmatpush2.msra.mxu0 0.0
    %639 = vmatprep.subr.mxu0 0.0
    %640 = vmatpush2.msra.mxu0 0.0
    %641 = vmatprep.subr.mxu0 0.0
    %642 = vmatpush2.msra.mxu0 0.0
    %643 = vmatprep.subr.mxu0 0.0
    %644 = vmatpush2.msra.mxu0 0.0
    %645 = vmatprep.subr.mxu0 0.0
    %646 = vmatpush2.msra.mxu0 0.0
    %647 = vmatprep.subr.mxu0 0.0
    %648 = vmatpush2.msra.mxu0 0.0
    %649 = vmatprep.subr.mxu0 0.0
    %650 = vmatpush2.msra.mxu0 0.0
    %651 = vmatprep.subr.mxu0 0.0
    %652 = vmatpush2.msra.mxu0 0.0
    %653 = vmatprep.subr.mxu0 0.0
    %654 = vmatpush2.msra.mxu0 0.0
    %655 = vmatprep.mubr.f32.mxu0 0.0
    %656 = vmatmul.mubr.f32.gmra.mxu0 %v589
    %v657 = vpop.f32.mrf.mxu0
    %v658 = vadd.f32 %v585, %v657
    %v659 = vpop.f32.mrf.mxu0
    %v660 = vadd.f32 %v585, %v659
    %661 = vdwg.mxu0
    %662 = vmatprep.subr.mxu0 0.0
    %663 = vmatpush1.msra.mxu0 0.0
    %664 = vmatprep.subr.mxu0 0.0
    %665 = vmatpush1.msra.mxu0 0.0
    %666 = vmatprep.subr.mxu0 0.0
    %667 = vmatpush1.msra.mxu0 0.0
    %668 = vmatprep.subr.mxu0 0.0
    %669 = vmatpush1.msra.mxu0 0.0
    %670 = vmatprep.subr.mxu0 0.0
    %671 = vmatpush1.msra.mxu0 0.0
    %672 = vmatprep.subr.mxu0 0.0
    %673 = vmatpush1.msra.mxu0 0.0
    %674 = vmatprep.subr.mxu0 0.0
    %675 = vmatpush1.msra.mxu0 0.0
    %676 = vmatprep.subr.mxu0 %v579
    %677 = vmatpush1.msra.mxu0 %v578
    %678 = vmatprep.subr.mxu0 %v524
    %679 = vmatpush1.msra.mxu0 %v523
    %680 = vmatprep.subr.mxu0 %v471
    %681 = vmatpush1.msra.mxu0 %v470
    %682 = vmatprep.subr.mxu0 %v416
    %683 = vmatpush1.msra.mxu0 %v415
    %684 = vmatprep.subr.mxu0 %v130
    %685 = vmatpush1.msra.mxu0 %v129
    %686 = vmatprep.subr.mxu0 %v363
    %687 = vmatpush1.msra.mxu0 %v362
    %688 = vmatprep.subr.mxu0 %v310
    %689 = vmatpush1.msra.mxu0 %v309
    %690 = vmatprep.subr.mxu0 %v251
    %691 = vmatpush1.msra.mxu0 %v250
    %692 = vmatprep.subr.mxu0 %v198
    %693 = vmatpush1.msra.mxu0 %v197
    %694 = vmatprep.subr.mxu0 0.0
    %695 = vmatpush2.msra.mxu0 0.0
    %696 = vmatprep.subr.mxu0 0.0
    %697 = vmatpush2.msra.mxu0 0.0
    %698 = vmatprep.subr.mxu0 0.0
    %699 = vmatpush2.msra.mxu0 0.0
    %700 = vmatprep.subr.mxu0 0.0
    %701 = vmatpush2.msra.mxu0 0.0
    %702 = vmatprep.subr.mxu0 0.0
    %703 = vmatpush2.msra.mxu0 0.0
    %704 = vmatprep.subr.mxu0 0.0
    %705 = vmatpush2.msra.mxu0 0.0
    %706 = vmatprep.subr.mxu0 0.0
    %707 = vmatpush2.msra.mxu0 0.0
    %708 = vmatprep.subr.mxu0 0.0
    %709 = vmatpush2.msra.mxu0 0.0
    %710 = vmatprep.subr.mxu0 0.0
    %711 = vmatpush2.msra.mxu0 0.0
    %712 = vmatprep.subr.mxu0 0.0
    %713 = vmatpush2.msra.mxu0 0.0
    %714 = vmatprep.subr.mxu0 0.0
    %715 = vmatpush2.msra.mxu0 0.0
    %716 = vmatprep.subr.mxu0 0.0
    %717 = vmatpush2.msra.mxu0 0.0
    %718 = vmatprep.subr.mxu0 0.0
    %719 = vmatpush2.msra.mxu0 0.0
    %720 = vmatprep.subr.mxu0 0.0
    %721 = vmatpush2.msra.mxu0 0.0
    %722 = vmatprep.subr.mxu0 0.0
    %723 = vmatpush2.msra.mxu0 0.0
    %724 = vmatprep.subr.mxu0 0.0
    %725 = vmatpush2.msra.mxu0 0.0
    %726 = vmatprep.mubr.f32.mxu0 0.0
    %727 = vmatmul.mubr.f32.gmra.mxu0 %v589
    %v728 = vpop.f32.mrf.mxu0
    %v729 = vadd.f32 %v585, %v728
    %v730 = vpop.f32.mrf.mxu0
    %v731 = vadd.f32 %v585, %v730
    %732 = vdwg.mxu0
    %v735 = vcombine.low %v658, %v660
    %737 = vst [vmem:[#allocation8] sm:$0xff] %v735
    %v740 = vcombine.low %v729, %v731
    %s742 = scalar_lea.vmem [#allocation8], 8
    %743 = vst [vmem:[%s742] sm:$0xff] %v740
    // Predicated region
    $region38: #{tpu_custom_call.1} parent=1 // pred_check
      _
    $region39: #{tpu_custom_call.1} parent=1 // pred_check_branch
      %745 = sbr.rel (0) target = $region41
    $region40: #{tpu_custom_call.1} parent=1 // pred_region
      %s747 = ssub.s32 256, 256
      %748 = vsyncadd [#allocation4], %s747
      %s749 = sshll.u32 [#allocation8], 4
      %s750 = int_to_ptr.vmem [resolvable:$true] %s749
      %755 = dma.vmem_to_hbm [thread:$0]  %s750, 256, %s6, [#allocation4], 128, 128, 8
    $region41: #{tpu_custom_call.1} parent=1 // pred_fallthru
      _
    // Predicated region
    $region42: #{tpu_custom_call.1} parent=1 // pred_check
      _
    $region43: #{tpu_custom_call.1} parent=1 // pred_check_branch
      %757 = sbr.rel (0) target = $region45
    $region44: #{tpu_custom_call.1} parent=1 // pred_region
      %758 = dma.done [#allocation4], 256
    $region45: #{tpu_custom_call.1} parent=1 // pred_fallthru
      _
    %759 = vsyncpa [#allocation3], 1
    %760 = vsyncpa [#allocation6], 1
    %761 = vsyncpa [#allocation4], 1

</llo_original>
